<compile_context>
chip_gen: v6e
topology: v6e:2x2x1
jax: 0.10.0
libtpu: 0.0.40
codegen_flags: <defaults>
</compile_context>

<pallas_src>
import functools

import jax
import jax.numpy as jnp
from jax import lax
from jax.experimental import pallas as pl
from jax.experimental.pallas import tpu as pltpu


def _round_up(v, m):
    return (v + m - 1) // m * m


def _lr_kernel(x_ref, w_ref, b_ref, o_ref, acc_ref):
    kk = pl.program_id(2)

    @pl.when(kk == 0)
    def _():
        acc_ref[...] = jnp.zeros_like(acc_ref)

    # x tile: (bm, bk), w tile: (bn, bk) -> contract on last dims -> (bm, bn)
    acc_ref[...] += lax.dot_general(
        x_ref[...],
        w_ref[...],
        dimension_numbers=(((1,), (1,)), ((), ())),
        preferred_element_type=jnp.float32,
    )

    @pl.when(kk == pl.num_programs(2) - 1)
    def _():
        y = acc_ref[...] + b_ref[...]            # (bm, bn) + (1, bn) broadcast
        o_ref[...] = jnp.maximum(y, 0.0).astype(o_ref.dtype)


@functools.partial(
    jax.jit, static_argnames=("block_m", "block_n", "block_k", "compute_dtype")
)
def lr_forward(x, weight, bias, *, block_m=256, block_n=256, block_k=512,
               compute_dtype=None):
    """y = relu(x @ weight.T + bias); weight is (out_features, in_features)."""
    m, k = x.shape
    n, k_w = weight.shape
    assert k == k_w, "weight in_features must match x"
    out_dtype = x.dtype

    # --- tile sizes (sublane/lane aligned, clamped for small problems) -----
    bm = min(block_m, _round_up(m, 8))          # multiple of 8
    bn = min(block_n, _round_up(n, 128))        # multiple of 128 (lane-dense out)
    if k <= block_k:
        bk = k                                  # full-K block == array dim: legal
    else:
        bk = _round_up(block_k, 128)

    m_pad = _round_up(m, bm)
    n_pad = _round_up(n, bn)
    k_pad = _round_up(k, bk)

    # --- zero-pad (exact: zero K columns contribute nothing, zero bias pad
    #     keeps ReLU of padded output columns at 0, all padding sliced off) --
    x_p = jnp.pad(x, ((0, m_pad - m), (0, k_pad - k)))
    w_p = jnp.pad(weight, ((0, n_pad - n), (0, k_pad - k)))
    b_p = jnp.pad(bias, (0, n_pad - n)).reshape(1, n_pad).astype(jnp.float32)

    if compute_dtype is not None:
        x_p = x_p.astype(compute_dtype)
        w_p = w_p.astype(compute_dtype)

    grid = (m_pad // bm, n_pad // bn, k_pad // bk)

    in_bytes = (x_p.size * x_p.dtype.itemsize
                + w_p.size * w_p.dtype.itemsize
                + b_p.size * b_p.dtype.itemsize)
    out_bytes = m_pad * n_pad * jnp.dtype(out_dtype).itemsize

    out_p = pl.pallas_call(
        _lr_kernel,
        out_shape=jax.ShapeDtypeStruct((m_pad, n_pad), out_dtype),
        grid_spec=pltpu.PrefetchScalarGridSpec(
            num_scalar_prefetch=0,
            grid=grid,
            in_specs=[
                pl.BlockSpec((bm, bk), lambda i, j, kk: (i, kk)),   # x
                pl.BlockSpec((bn, bk), lambda i, j, kk: (j, kk)),   # weight (out,in)
                pl.BlockSpec((1, bn), lambda i, j, kk: (0, j)),     # bias
            ],
            out_specs=pl.BlockSpec((bm, bn), lambda i, j, kk: (i, j)),
            scratch_shapes=[pltpu.VMEM((bm, bn), jnp.float32)],
        ),
        compiler_params=pltpu.CompilerParams(
            dimension_semantics=("parallel", "parallel", "arbitrary"),
        ),
        cost_estimate=pl.CostEstimate(
            flops=2 * m_pad * n_pad * k_pad,
            transcendentals=0,
            bytes_accessed=in_bytes + out_bytes,
        ),
    )(x_p, w_p, b_p)

    return out_p[:m, :n]


def lr_reference(x, weight, bias):
    return jnp.maximum(x @ weight.T + bias, 0.0)


if __name__ == "__main__":
    # Small shapes consistent with nn.Linear(in_features, out_features)
    batch, in_features, out_features = 16, 32, 8

    key = jax.random.PRNGKey(0)
    kx, kw, kb = jax.random.split(key, 3)

    x = jax.random.normal(kx, (batch, in_features), dtype=jnp.float32)

    # Deterministic init mirroring nn.Linear: U(-1/sqrt(in), 1/sqrt(in))
    bound = 1.0 / (in_features ** 0.5)
    weight = jax.random.uniform(
        kw, (out_features, in_features), minval=-bound, maxval=bound,
        dtype=jnp.float32,
    )
    bias = jax.random.uniform(
        kb, (out_features,), minval=-bound, maxval=bound, dtype=jnp.float32
    )

    y = lr_forward(x, weight, bias)            # f32 path: bit-exact vs reference
    y = jax.block_until_ready(y)

    y_ref = lr_reference(x, weight, bias)
    assert y.shape == (batch, out_features)
    assert jnp.allclose(y, y_ref, atol=1e-5, rtol=1e-5), "mismatch vs reference"

    print("KERNEL_OK")
</pallas_src>

<mosaic_0001>
module attributes {stable_mosaic.version = 11 : i64} {
  func.func @_lr_kernel(%arg0: i32, %arg1: i32, %arg2: i32, %arg3: memref<16x32xf32, #tpu.memory_space<vmem>>, %arg4: memref<128x32xf32, #tpu.memory_space<vmem>>, %arg5: memref<1x128xf32, #tpu.memory_space<vmem>>, %arg6: memref<16x128xf32, #tpu.memory_space<vmem>>, %arg7: memref<16x128xf32, #tpu.memory_space<vmem>>) attributes {dimension_semantics = [#tpu.dimension_semantics<parallel>, #tpu.dimension_semantics<parallel>, #tpu.dimension_semantics<arbitrary>], iteration_bounds = array<i64: 1, 1, 1>, scalar_prefetch = 0 : i64, scratch_operands = 1 : i64, tpu.core_type = #tpu.core_type<tc>, window_params = [{transform_indices = @transform_0, window_bounds = array<i64: 16, 32>}, {transform_indices = @transform_1, window_bounds = array<i64: 128, 32>}, {transform_indices = @transform_2, window_bounds = array<i64: 1, 128>}, {transform_indices = @transform_3, window_bounds = array<i64: 16, 128>}]} {
    %c0_i32 = arith.constant 0 : i32
    %0 = arith.cmpi eq, %arg2, %c0_i32 : i32
    %1 = arith.extui %0 : i1 to i32
    %c0_i32_0 = arith.constant 0 : i32
    %2 = arith.cmpi ne, %1, %c0_i32_0 : i32
    scf.if %2 {
      %cst_10 = arith.constant 0.000000e+00 : f32
      %12 = vector.broadcast %cst_10 : f32 to vector<16x128xf32>
      %c0_11 = arith.constant 0 : index
      %c0_12 = arith.constant 0 : index
      %13 = vector.load %arg7[%c0_11, %c0_12] : memref<16x128xf32, #tpu.memory_space<vmem>>, vector<16x128xf32>
      tpu.vector_store %arg7[%c0_11, %c0_12], %12 {strides = array<i32>} : memref<16x128xf32, #tpu.memory_space<vmem>>, vector<16x128xf32>,
    } else {
    }
    %c0 = arith.constant 0 : index
    %c0_1 = arith.constant 0 : index
    %3 = vector.load %arg7[%c0, %c0_1] : memref<16x128xf32, #tpu.memory_space<vmem>>, vector<16x128xf32>
    %c0_2 = arith.constant 0 : index
    %c0_3 = arith.constant 0 : index
    %4 = vector.load %arg3[%c0_2, %c0_3] : memref<16x32xf32, #tpu.memory_space<vmem>>, vector<16x32xf32>
    %c0_4 = arith.constant 0 : index
    %c0_5 = arith.constant 0 : index
    %5 = vector.load %arg4[%c0_4, %c0_5] : memref<128x32xf32, #tpu.memory_space<vmem>>, vector<128x32xf32>
    %cst = arith.constant dense<0.000000e+00> : vector<16x128xf32>
    %6 = tpu.matmul %4, %5, %cst {dimension_numbers = #tpu.dot_dimension_numbers<[1], [1], [0], [0], [0, 0, 1, 0], [], []>} : vector<16x32xf32>, vector<128x32xf32>, vector<16x128xf32> -> vector<16x128xf32>
    %7 = arith.addf %3, %6 : vector<16x128xf32>
    %c0_6 = arith.constant 0 : index
    %c0_7 = arith.constant 0 : index
    %8 = vector.load %arg7[%c0_6, %c0_7] : memref<16x128xf32, #tpu.memory_space<vmem>>, vector<16x128xf32>
    tpu.vector_store %arg7[%c0_6, %c0_7], %7 {strides = array<i32>} : memref<16x128xf32, #tpu.memory_space<vmem>>, vector<16x128xf32>,
    %c0_i32_8 = arith.constant 0 : i32
    %9 = arith.cmpi eq, %arg2, %c0_i32_8 : i32
    %10 = arith.extui %9 : i1 to i32
    %c0_i32_9 = arith.constant 0 : i32
    %11 = arith.cmpi ne, %10, %c0_i32_9 : i32
    scf.if %11 {
      %c0_10 = arith.constant 0 : index
      %c0_11 = arith.constant 0 : index
      %12 = vector.load %arg7[%c0_10, %c0_11] : memref<16x128xf32, #tpu.memory_space<vmem>>, vector<16x128xf32>
      %c0_12 = arith.constant 0 : index
      %c0_13 = arith.constant 0 : index
      %13 = vector.load %arg5[%c0_12, %c0_13] : memref<1x128xf32, #tpu.memory_space<vmem>>, vector<1x128xf32>
      %14 = vector.broadcast %13 : vector<1x128xf32> to vector<16x128xf32>
      %15 = arith.addf %12, %14 : vector<16x128xf32>
      %cst_14 = arith.constant 0.000000e+00 : f32
      %16 = vector.broadcast %cst_14 : f32 to vector<16x128xf32>
      %17 = arith.maximumf %15, %16 : vector<16x128xf32>
      %c0_15 = arith.constant 0 : index
      %c0_16 = arith.constant 0 : index
      %18 = vector.load %arg6[%c0_15, %c0_16] : memref<16x128xf32, #tpu.memory_space<vmem>>, vector<16x128xf32>
      tpu.vector_store %arg6[%c0_15, %c0_16], %17 {strides = array<i32>} : memref<16x128xf32, #tpu.memory_space<vmem>>, vector<16x128xf32>,
    } else {
    }
    return
  }
  func.func @transform_0(%arg0: i32, %arg1: i32, %arg2: i32) -> (i32, i32) {
    %c0_i32 = arith.constant 0 : i32
    return %arg0, %arg2 : i32, i32
  }
  func.func @transform_1(%arg0: i32, %arg1: i32, %arg2: i32) -> (i32, i32) {
    %c0_i32 = arith.constant 0 : i32
    return %arg1, %arg2 : i32, i32
  }
  func.func @transform_2(%arg0: i32, %arg1: i32, %arg2: i32) -> (i32, i32) {
    %c0_i32 = arith.constant 0 : i32
    %c0_i32_0 = arith.constant 0 : i32
    return %c0_i32, %arg1 : i32, i32
  }
  func.func @transform_3(%arg0: i32, %arg1: i32, %arg2: i32) -> (i32, i32) {
    %c0_i32 = arith.constant 0 : i32
    return %arg0, %arg1 : i32, i32
  }
}

</mosaic_0001>

<llo_original>
// kernel: lr_forward.1
$region0: #{lr_forward.1}
  #allocation0 [shape = 'u32[]', space=smem, size = 0x4, offset = 0x4, fixed_abs, tag = 'smem constant byte address 0x4 - core index']
  #allocation1 [shape = 'u32[144,128]{1,0:T(1,128)}', space=vmem, size = 0x12000, scoped, tag = 'internal scratch']
  #allocation2 [shape = 'f32[16,128]{1,0:T(8,128)}', space=vmem, size = 0x2000, scoped, tag = 'scratch operand']
  %s0 = inlined_call_operand.vmem [shape: f32[16,32], index: 0, kind: input, shape index: {}]
  %s1 = inlined_call_operand.vmem [shape: f32[128,32], index: 1, kind: input, shape index: {}]
  %s2 = inlined_call_operand.vmem [shape: f32[1,128], index: 2, kind: input, shape index: {}]
  %s3 = inlined_call_operand.vmem [shape: f32[16,128], index: 3, kind: output, shape index: {}]
  %s4 = sld [smem:[#allocation0]]
  $region30: #{lr_forward.1} parent=0
    _
  %s6 = ssub.s32 1, %s4
  %s7 = scalar_select 0, %s6, %s4
  // Predicated region
  $region2: #{lr_forward.1} parent=0 // pred_check
    _
  $region3: #{lr_forward.1} parent=0 // pred_check_branch
    %9 = sbr.rel (0) target = $region5
  $region4: #{lr_forward.1} parent=0 // pred_region
    _
  $region5: #{lr_forward.1} parent=0 // pred_fallthru
    _
  // Predicated region
  $region6: #{lr_forward.1} parent=0 // pred_check
    _
  $region7: #{lr_forward.1} parent=0 // pred_check_branch
    %11 = sbr.rel (0) target = $region9
  $region8: #{lr_forward.1} parent=0 // pred_region
    _
  $region9: #{lr_forward.1} parent=0 // pred_fallthru
    _
  // Predicated region
  $region10: #{lr_forward.1} parent=0 // pred_check
    _
  $region11: #{lr_forward.1} parent=0 // pred_check_branch
    %13 = sbr.rel (0) target = $region13
  $region12: #{lr_forward.1} parent=0 // pred_region
    _
  $region13: #{lr_forward.1} parent=0 // pred_fallthru
    _
  %p14 = scmp.eq.s32.totalorder 0, 0
  // Predicated region
  $region14: #{lr_forward.1} parent=0 // pred_check
    %p15 = pneg %p14
  $region15: #{lr_forward.1} parent=0 // pred_check_branch
    %17 = sbr.rel (%p15) target = $region17
  $region16: #{lr_forward.1} parent=0 // pred_region
    %18 = vst [vmem:[#allocation2] sm:$0xff] 0.0
    %19 = vst [vmem:[#allocation2 + $0x8] sm:$0xff] 0.0
  $region17: #{lr_forward.1} parent=0 // pred_fallthru
    _
  %v20 = vld [vmem:[#allocation2] sm:$0xff]
  %v21 = vld [vmem:[#allocation2 + $0x8] sm:$0xff]
  %v22 = vld [vmem:[%s0] sm:$0xff]
  %v23 = vld [vmem:[%s0 + $0x8] sm:$0xff]
  %v24 = vld [vmem:[%s1] sm:$0xff]
  %v25 = vld [vmem:[%s1 + $0x8] sm:$0xff]
  %v26 = vld [vmem:[%s1 + $0x10] sm:$0xff]
  %v27 = vld [vmem:[%s1 + $0x18] sm:$0xff]
  %v28 = vld [vmem:[%s1 + $0x20] sm:$0xff]
  %v29 = vld [vmem:[%s1 + $0x28] sm:$0xff]
  %v30 = vld [vmem:[%s1 + $0x30] sm:$0xff]
  %v31 = vld [vmem:[%s1 + $0x38] sm:$0xff]
  %v32 = vld [vmem:[%s1 + $0x40] sm:$0xff]
  %v33 = vld [vmem:[%s1 + $0x48] sm:$0xff]
  %v34 = vld [vmem:[%s1 + $0x50] sm:$0xff]
  %v35 = vld [vmem:[%s1 + $0x58] sm:$0xff]
  %v36 = vld [vmem:[%s1 + $0x60] sm:$0xff]
  %v37 = vld [vmem:[%s1 + $0x68] sm:$0xff]
  %v38 = vld [vmem:[%s1 + $0x70] sm:$0xff]
  %v39 = vld [vmem:[%s1 + $0x78] sm:$0xff]
  %vm40 = vcmask 261120
  %v42 = vsel %vm40, %v22, 0
  %v45 = vsel %vm40, %v23, 0
  %v48 = vsel %vm40, %v24, 0
  %v51 = vsel %vm40, %v25, 0
  %v54 = vsel %vm40, %v26, 0
  %v57 = vsel %vm40, %v27, 0
  %v60 = vsel %vm40, %v28, 0
  %v63 = vsel %vm40, %v29, 0
  %v66 = vsel %vm40, %v30, 0
  %v69 = vsel %vm40, %v31, 0
  %v72 = vsel %vm40, %v32, 0
  %v75 = vsel %vm40, %v33, 0
  %v78 = vsel %vm40, %v34, 0
  %v81 = vsel %vm40, %v35, 0
  %v84 = vsel %vm40, %v36, 0
  %v87 = vsel %vm40, %v37, 0
  %v90 = vsel %vm40, %v38, 0
  %v93 = vsel %vm40, %v39, 0
  %95 = vmatprep.subr.mxu0 0.0
  %96 = vmatpush1.xpose.msra.mxu0 %v93
  %97 = vmatprep.subr.mxu0 0.0
  %98 = vmatpush1.xpose.msra.mxu0 %v90
  %99 = vmatprep.subr.mxu0 0.0
  %100 = vmatpush1.xpose.msra.mxu0 %v87
  %101 = vmatprep.subr.mxu0 0.0
  %102 = vmatpush1.xpose.msra.mxu0 %v84
  %103 = vmatprep.subr.mxu0 0.0
  %104 = vmatpush1.xpose.msra.mxu0 %v81
  %105 = vmatprep.subr.mxu0 0.0
  %106 = vmatpush1.xpose.msra.mxu0 %v78
  %107 = vmatprep.subr.mxu0 0.0
  %108 = vmatpush1.xpose.msra.mxu0 %v75
  %109 = vmatprep.subr.mxu0 0.0
  %110 = vmatpush1.xpose.msra.mxu0 %v72
  %111 = vmatprep.subr.mxu0 0.0
  %112 = vmatpush1.xpose.msra.mxu0 %v69
  %113 = vmatprep.subr.mxu0 0.0
  %114 = vmatpush1.xpose.msra.mxu0 %v66
  %115 = vmatprep.subr.mxu0 0.0
  %116 = vmatpush1.xpose.msra.mxu0 %v63
  %117 = vmatprep.subr.mxu0 0.0
  %118 = vmatpush1.xpose.msra.mxu0 %v60
  %119 = vmatprep.subr.mxu0 0.0
  %120 = vmatpush1.xpose.msra.mxu0 %v57
  %121 = vmatprep.subr.mxu0 0.0
  %122 = vmatpush1.xpose.msra.mxu0 %v54
  %123 = vmatprep.subr.mxu0 0.0
  %124 = vmatpush1.xpose.msra.mxu0 %v51
  %125 = vmatprep.subr.mxu0 0.0
  %126 = vmatpush1.xpose.msra.mxu0 %v48
  %127 = vmatprep.subr.mxu0 0.0
  %128 = vmatpush2.xpose.msra.mxu0 0.0
  %129 = vmatprep.subr.mxu0 0.0
  %130 = vmatpush2.xpose.msra.mxu0 0.0
  %131 = vmatprep.subr.mxu0 0.0
  %132 = vmatpush2.xpose.msra.mxu0 0.0
  %133 = vmatprep.subr.mxu0 0.0
  %134 = vmatpush2.xpose.msra.mxu0 0.0
  %135 = vmatprep.subr.mxu0 0.0
  %136 = vmatpush2.xpose.msra.mxu0 0.0
  %137 = vmatprep.subr.mxu0 0.0
  %138 = vmatpush2.xpose.msra.mxu0 0.0
  %139 = vmatprep.subr.mxu0 0.0
  %140 = vmatpush2.xpose.msra.mxu0 0.0
  %141 = vmatprep.subr.mxu0 0.0
  %142 = vmatpush2.xpose.msra.mxu0 0.0
  %143 = vmatprep.subr.mxu0 0.0
  %144 = vmatpush2.xpose.msra.mxu0 0.0
  %145 = vmatprep.subr.mxu0 0.0
  %146 = vmatpush2.xpose.msra.mxu0 0.0
  %147 = vmatprep.subr.mxu0 0.0
  %148 = vmatpush2.xpose.msra.mxu0 0.0
  %149 = vmatprep.subr.mxu0 0.0
  %150 = vmatpush2.xpose.msra.mxu0 0.0
  %151 = vmatprep.subr.mxu0 0.0
  %152 = vmatpush2.xpose.msra.mxu0 0.0
  %153 = vmatprep.subr.mxu0 0.0
  %154 = vmatpush2.xpose.msra.mxu0 0.0
  %155 = vmatprep.subr.mxu0 0.0
  %156 = vmatpush2.xpose.msra.mxu0 0.0
  %157 = vmatprep.subr.mxu0 0.0
  %158 = vmatpush2.xpose.msra.mxu0 0.0
  %159 = vmatprep.mubr.f32.mxu0 0.0
  %160 = vmatmul.mubr.f32.gmra.mxu0 %v42
  %v161 = vpop.f32.mrf.mxu0
  %v162 = vadd.f32 0.0, %v161
  %v163 = vpop.f32.mrf.mxu0
  %164 = vmatprep.mubr.f32.mxu0 0.0
  %165 = vmatmul.mubr.f32.gmra.mxu0 %v45
  %v166 = vpop.f32.mrf.mxu0
  %v167 = vadd.f32 0.0, %v166
  %v168 = vpop.f32.mrf.mxu0
  %169 = vdwg.mxu0
  %v170 = vadd.f32 %v20, %v162
  %v171 = vadd.f32 %v21, %v167
  %172 = vst [vmem:[#allocation2] sm:$0xff] %v170
  %173 = vst [vmem:[#allocation2 + $0x8] sm:$0xff] %v171
  // Predicated region
  $region18: #{lr_forward.1} parent=0 // pred_check
    %p174 = pneg %p14
  $region19: #{lr_forward.1} parent=0 // pred_check_branch
    %176 = sbr.rel (%p174) target = $region21
  $region20: #{lr_forward.1} parent=0 // pred_region
    %v177 = vld [vmem:[#allocation2] sm:$0xff]
    %v178 = vld [vmem:[#allocation2 + $0x8] sm:$0xff]
    %v179 = vld [vmem:[%s2] sm:$0x1]
    %v181 = vlaneseq
    %v182 = vshrl.u32 %v181, 7
    %v183 = vsub.s32 0, %v182
    %v184 = vrot.slane %v179, %v183
    %v186 = vadd.f32 %v177, %v184
    %v187 = vadd.f32 %v178, %v184
    %v188 = vmax.f32 %v186, 0.0
    %v189 = vmax.f32 %v187, 0.0
    %190 = vst [vmem:[%s3] sm:$0xff] %v188
    %191 = vst [vmem:[%s3 + $0x8] sm:$0xff] %v189
  $region21: #{lr_forward.1} parent=0 // pred_fallthru
    _
  // Predicated region
  $region22: #{lr_forward.1} parent=0 // pred_check
    _
  $region23: #{lr_forward.1} parent=0 // pred_check_branch
    %193 = sbr.rel (0) target = $region25
  $region24: #{lr_forward.1} parent=0 // pred_region
    _
  $region25: #{lr_forward.1} parent=0 // pred_fallthru
    _
  // Predicated region
  $region26: #{lr_forward.1} parent=0 // pred_check
    _
  $region27: #{lr_forward.1} parent=0 // pred_check_branch
    %195 = sbr.rel (0) target = $region29
  $region28: #{lr_forward.1} parent=0 // pred_region
    _
  $region29: #{lr_forward.1} parent=0 // pred_fallthru
    _

</llo_original>
